<compile_context>
chip_gen: v6e
topology: v6e:2x2x1
jax: 0.10.0
libtpu: 0.0.40
codegen_flags: <defaults>
</compile_context>

<pallas_src>
import functools

import jax
import jax.numpy as jnp
from jax.experimental import pallas as pl
from jax.experimental.pallas import tpu as pltpu

DIM_X = 1
DIM_Y = 1
DIM_IN = DIM_X + DIM_Y
DIM_HID = 128


def _pooling_encoder_kernel(xc_ref, yc_ref, w1_ref, ws_ref, bs_ref, o_ref, *, n_true):
    TB, N_pad, dx = xc_ref.shape
    dy = yc_ref.shape[-1]
    H = o_ref.shape[-1]

    # --- net_pre layer 1 (K = dx+dy = 2): VPU broadcast-FMA, keep the MXU free ---
    acc = bs_ref[0:1, :].reshape(1, 1, H)                     # (1,1,H) f32 bias
    xcv = xc_ref[...]                                         # (TB, N_pad, dx) f32
    ycv = yc_ref[...]                                         # (TB, N_pad, dy) f32
    for d in range(dx):                                       # static unroll (dx = 1)
        acc = acc + xcv[:, :, d:d + 1] * w1_ref[d:d + 1, :].reshape(1, 1, H)
    for d in range(dy):                                       # static unroll (dy = 1)
        acc = acc + ycv[:, :, d:d + 1] * w1_ref[dx + d:dx + d + 1, :].reshape(1, 1, H)
    h = jnp.maximum(acc, 0.0)                                 # (TB, N_pad, H) f32
    h = h.reshape(TB * N_pad, H)                              # big-M activation slab

    # --- net_pre layers 2, 3: bf16 into the MXU, f32 accumulation, ReLU ---
    for li in range(2):
        h = jnp.dot(h.astype(jnp.bfloat16), ws_ref[li],
                    preferred_element_type=jnp.float32) + bs_ref[li + 1:li + 2, :]
        h = jnp.maximum(h, 0.0)

    # --- mean pool over the set dim (moved before pre-layer-4: it has no ReLU and
    #     the mean is linear, so W4 was folded into Wp1 in the wrapper) ---
    h = h.reshape(TB, N_pad, H)                               # pure sublane regroup (N_pad % 8 == 0)
    if n_true != N_pad:                                       # mask zero-padded set rows
        set_idx = jax.lax.broadcasted_iota(jnp.int32, (1, N_pad, 1), 1)
        h = jnp.where(set_idx < n_true, h, 0.0)
    pooled = jnp.sum(h, axis=1) * (1.0 / n_true)              # (TB, H) f32, per-batch mean

    # --- folded (pre-layer-4 o post-layer-1): relu(pooled @ (w4@wp1) + (b4@wp1+bp1)) ---
    g = jnp.dot(pooled.astype(jnp.bfloat16), ws_ref[2],
                preferred_element_type=jnp.float32) + bs_ref[3:4, :]
    g = jnp.maximum(g, 0.0)
    # --- post-layer-2 ---
    g = jnp.dot(g.astype(jnp.bfloat16), ws_ref[3],
                preferred_element_type=jnp.float32) + bs_ref[4:5, :]

    o_ref[...] = g.astype(o_ref.dtype)                        # (TB, H) dense store


def _choose_tile_b(B, N_pad, target_rows=4096):
    """Batch tile: TB*N ~ target_rows, TB a multiple of 8, >= 2 grid steps when possible."""
    tb = max(1, target_rows // max(N_pad, 1))
    tb = max(8, (tb // 8) * 8)              # sublane-dense (TB,128) output; (8,128) rule
    b_pad8 = -(-B // 8) * 8
    tb = min(tb, b_pad8)
    if tb >= b_pad8 and b_pad8 >= 16:       # keep >= 2 steps so v7x's 2 TCs both get work
        tb = -(-(b_pad8 // 2) // 8) * 8
    return tb


def pooling_encoder(xc, yc, params):
    """xc: [B,N,dim_x], yc: [B,N,dim_y] -> [B, DIM_HID] (mask=None, use_lat=False)."""
    (w1, b1, w2, b2, w3, b3, w4, b4, wp1, bp1, wp2, bp2) = params
    B, N, dx = xc.shape
    dy = yc.shape[-1]
    H = DIM_HID
    f32 = jnp.float32

    # Fold pre-layer-4 (no ReLU) through the linear mean pool into post-layer-1 (in f32,
    # before the single bf16 cast).
    w_fold = w4.astype(f32) @ wp1.astype(f32)                                   # (H,H)
    b_fold = (b4.reshape(1, -1).astype(f32) @ wp1.astype(f32)
              + bp1.reshape(1, -1).astype(f32)).reshape(-1)                     # (H,)

    w_stack = jnp.stack([w2, w3, w_fold, wp2]).astype(jnp.bfloat16)             # (4,H,H)
    b_stack = jnp.stack([b1.reshape(-1), b2.reshape(-1), b3.reshape(-1),
                         b_fold, bp2.reshape(-1)]).astype(f32)                  # (5,H)
    w1f = w1.astype(f32)                                                        # (dx+dy,H)

    # Pad the set dim to a multiple of 8 (padded rows are masked in-kernel) and the batch
    # dim to a multiple of TB (padded batch rows sliced off); one pad per input at most.
    N_pad = -(-N // 8) * 8
    TB = _choose_tile_b(B, N_pad)
    B_pad = -(-B // TB) * TB
    if (N_pad != N) or (B_pad != B):
        pad = ((0, B_pad - B), (0, N_pad - N), (0, 0))
        xc = jnp.pad(xc, pad)
        yc = jnp.pad(yc, pad)
    xc = xc.astype(f32)
    yc = yc.astype(f32)

    kernel = functools.partial(_pooling_encoder_kernel, n_true=N)

    out = pl.pallas_call(
        kernel,
        out_shape=jax.ShapeDtypeStruct((B_pad, H), f32),
        grid_spec=pltpu.PrefetchScalarGridSpec(
            num_scalar_prefetch=0,
            grid=(B_pad // TB,),
            in_specs=[
                pl.BlockSpec((TB, N_pad, dx), lambda b: (b, 0, 0)),   # xc batch tile
                pl.BlockSpec((TB, N_pad, dy), lambda b: (b, 0, 0)),   # yc batch tile
                pl.BlockSpec((dx + dy, H), lambda b: (0, 0)),         # layer-1 weight (f32, VPU)
                pl.BlockSpec((4, H, H), lambda b: (0, 0, 0)),         # stacked weights (bf16, MXU)
                pl.BlockSpec((5, H), lambda b: (0, 0)),               # stacked biases (f32)
            ],
            out_specs=pl.BlockSpec((TB, H), lambda b: (b, 0)),
        ),
        compiler_params=pltpu.CompilerParams(
            dimension_semantics=("parallel",),
            vmem_limit_bytes=32 * 1024 * 1024),
    )(xc, yc, w1f, w_stack, b_stack)
    return out[:B]


def init_params(key):
    """Deterministic init mimicking nn.Linear's U(-1/sqrt(fan_in), 1/sqrt(fan_in))."""
    shapes = [
        (DIM_IN, DIM_HID), (DIM_HID,),     # pre layer 1
        (DIM_HID, DIM_HID), (DIM_HID,),    # pre layer 2
        (DIM_HID, DIM_HID), (DIM_HID,),    # pre layer 3
        (DIM_HID, DIM_HID), (DIM_HID,),    # pre layer 4
        (DIM_HID, DIM_HID), (DIM_HID,),    # post layer 1
        (DIM_HID, DIM_HID), (DIM_HID,),    # post layer 2
    ]
    params = []
    keys = jax.random.split(key, len(shapes))
    for k, s in zip(keys, shapes):
        fan_in = s[0] if len(s) == 2 else DIM_HID
        bound = 1.0 / jnp.sqrt(jnp.float32(fan_in))
        p = jax.random.uniform(k, s, jnp.float32, -bound, bound)
        if len(s) == 1:
            p = p.reshape(1, -1)   # biases as (1, H)
        params.append(p)
    return tuple(params)


def reference(xc, yc, params):
    """Pure-JAX f32 reference of the PyTorch forward (mask=None, use_lat=False)."""
    (w1, b1, w2, b2, w3, b3, w4, b4, wp1, bp1, wp2, bp2) = params
    h = jnp.concatenate([xc, yc], axis=-1)
    h = jax.nn.relu(h @ w1 + b1)
    h = jax.nn.relu(h @ w2 + b2)
    h = jax.nn.relu(h @ w3 + b3)
    h = h @ w4 + b4
    pooled = h.mean(axis=-2)
    g = jax.nn.relu(pooled @ wp1 + bp1)
    return g @ wp2 + bp2


# TODO(synk): the optional external `mask` path (masked sum / mask-count + 1e-5
#             normalization) and the use_lat=True Normal(mu, 0.1+0.9*sigmoid(sigma))
#             head are not implemented (deterministic mask=None path only).
# TODO(synk): for very large sets (N >> 4096) a second grid axis over the set dim
#             with a pooled f32 scratch accumulator would bound the per-step slab.

if __name__ == "__main__":
    key = jax.random.PRNGKey(0)
    kx, ky, kp = jax.random.split(key, 3)
    params = init_params(kp)

    # Case 1: B pads to a multiple of TB (2 grid steps), N already a multiple of 8.
    B, N = 10, 8
    xc = jax.random.normal(kx, (B, N, DIM_X), jnp.float32)
    yc = jax.random.normal(ky, (B, N, DIM_Y), jnp.float32)
    out = jax.block_until_ready(pooling_encoder(xc, yc, params))
    ref = reference(xc, yc, params)
    assert out.shape == (B, DIM_HID), out.shape
    # bf16 MXU inputs with f32 accumulation: loosened tolerance vs. the f32 reference.
    assert jnp.allclose(out, ref, rtol=5e-2, atol=5e-2), (
        float(jnp.max(jnp.abs(out - ref))))

    # Case 2: N not a multiple of 8 (exercises the in-kernel set-padding mask) + batch pad.
    B2, N2 = 4, 6
    xc2 = jax.random.normal(jax.random.PRNGKey(1), (B2, N2, DIM_X), jnp.float32)
    yc2 = jax.random.normal(jax.random.PRNGKey(2), (B2, N2, DIM_Y), jnp.float32)
    out2 = jax.block_until_ready(pooling_encoder(xc2, yc2, params))
    ref2 = reference(xc2, yc2, params)
    assert out2.shape == (B2, DIM_HID), out2.shape
    assert jnp.allclose(out2, ref2, rtol=5e-2, atol=5e-2), (
        float(jnp.max(jnp.abs(out2 - ref2))))

    print("KERNEL_OK")
</pallas_src>

<mosaic_0001>
module attributes {stable_mosaic.version = 11 : i64} {
  func.func @_pooling_encoder_kernel(%arg0: i32, %arg1: memref<8x8x1xf32, #tpu.memory_space<vmem>>, %arg2: memref<8x8x1xf32, #tpu.memory_space<vmem>>, %arg3: memref<2x128xf32, #tpu.memory_space<vmem>>, %arg4: memref<4x128x128xbf16, #tpu.memory_space<vmem>>, %arg5: memref<5x128xf32, #tpu.memory_space<vmem>>, %arg6: memref<8x128xf32, #tpu.memory_space<vmem>>) attributes {dimension_semantics = [#tpu.dimension_semantics<parallel>], iteration_bounds = array<i64: 2>, scalar_prefetch = 0 : i64, scratch_operands = 0 : i64, tpu.core_type = #tpu.core_type<tc>, window_params = [{transform_indices = @transform_0, window_bounds = array<i64: 8, 8, 1>}, {transform_indices = @transform_1, window_bounds = array<i64: 8, 8, 1>}, {pipeline_mode = #tpu.pipeline_mode<synchronous>, transform_indices = @transform_2, window_bounds = array<i64: 2, 128>}, {pipeline_mode = #tpu.pipeline_mode<synchronous>, transform_indices = @transform_3, window_bounds = array<i64: 4, 128, 128>}, {pipeline_mode = #tpu.pipeline_mode<synchronous>, transform_indices = @transform_4, window_bounds = array<i64: 5, 128>}, {transform_indices = @transform_5, window_bounds = array<i64: 8, 128>}]} {
    %c0 = arith.constant 0 : index
    %c0_0 = arith.constant 0 : index
    %0 = vector.load %arg5[%c0, %c0_0] : memref<5x128xf32, #tpu.memory_space<vmem>>, vector<1x128xf32>
    %1 = vector.shape_cast %0 : vector<1x128xf32> to vector<1x1x128xf32>
    %c0_1 = arith.constant 0 : index
    %c0_2 = arith.constant 0 : index
    %c0_3 = arith.constant 0 : index
    %2 = vector.load %arg1[%c0_1, %c0_2, %c0_3] : memref<8x8x1xf32, #tpu.memory_space<vmem>>, vector<8x8x1xf32>
    %c0_4 = arith.constant 0 : index
    %c0_5 = arith.constant 0 : index
    %c0_6 = arith.constant 0 : index
    %3 = vector.load %arg2[%c0_4, %c0_5, %c0_6] : memref<8x8x1xf32, #tpu.memory_space<vmem>>, vector<8x8x1xf32>
    %c0_7 = arith.constant 0 : index
    %c0_8 = arith.constant 0 : index
    %4 = vector.load %arg3[%c0_7, %c0_8] : memref<2x128xf32, #tpu.memory_space<vmem>>, vector<1x128xf32>
    %5 = vector.shape_cast %4 : vector<1x128xf32> to vector<1x1x128xf32>
    %6 = vector.broadcast %2 : vector<8x8x1xf32> to vector<8x8x128xf32>
    %7 = vector.broadcast %5 : vector<1x1x128xf32> to vector<8x8x128xf32>
    %8 = arith.mulf %6, %7 : vector<8x8x128xf32>
    %9 = vector.broadcast %1 : vector<1x1x128xf32> to vector<8x8x128xf32>
    %10 = arith.addf %9, %8 : vector<8x8x128xf32>
    %c1 = arith.constant 1 : index
    %c0_9 = arith.constant 0 : index
    %11 = vector.load %arg3[%c1, %c0_9] : memref<2x128xf32, #tpu.memory_space<vmem>>, vector<1x128xf32>
    %12 = vector.shape_cast %11 : vector<1x128xf32> to vector<1x1x128xf32>
    %13 = vector.broadcast %3 : vector<8x8x1xf32> to vector<8x8x128xf32>
    %14 = vector.broadcast %12 : vector<1x1x128xf32> to vector<8x8x128xf32>
    %15 = arith.mulf %13, %14 : vector<8x8x128xf32>
    %16 = arith.addf %10, %15 : vector<8x8x128xf32>
    %cst = arith.constant 0.000000e+00 : f32
    %17 = vector.broadcast %cst : f32 to vector<8x8x128xf32>
    %18 = arith.maximumf %16, %17 : vector<8x8x128xf32>
    %19 = vector.shape_cast %18 : vector<8x8x128xf32> to vector<64x128xf32>
    %20 = arith.truncf %19 : vector<64x128xf32> to vector<64x128xbf16>
    %c0_10 = arith.constant 0 : index
    %c0_11 = arith.constant 0 : index
    %c0_12 = arith.constant 0 : index
    %21 = vector.load %arg4[%c0_10, %c0_11, %c0_12] : memref<4x128x128xbf16, #tpu.memory_space<vmem>>, vector<1x128x128xbf16>
    %22 = vector.shape_cast %21 : vector<1x128x128xbf16> to vector<128x128xbf16>
    %cst_13 = arith.constant dense<0.000000e+00> : vector<64x128xf32>
    %23 = tpu.matmul %20, %22, %cst_13 {dimension_numbers = #tpu.dot_dimension_numbers<[1], [0], [0], [1], [0, 0, 1, 1], [], []>} : vector<64x128xbf16>, vector<128x128xbf16>, vector<64x128xf32> -> vector<64x128xf32>
    %c1_14 = arith.constant 1 : index
    %c0_15 = arith.constant 0 : index
    %24 = vector.load %arg5[%c1_14, %c0_15] : memref<5x128xf32, #tpu.memory_space<vmem>>, vector<1x128xf32>
    %25 = vector.broadcast %24 : vector<1x128xf32> to vector<64x128xf32>
    %26 = arith.addf %23, %25 : vector<64x128xf32>
    %cst_16 = arith.constant 0.000000e+00 : f32
    %27 = vector.broadcast %cst_16 : f32 to vector<64x128xf32>
    %28 = arith.maximumf %26, %27 : vector<64x128xf32>
    %29 = arith.truncf %28 : vector<64x128xf32> to vector<64x128xbf16>
    %c1_17 = arith.constant 1 : index
    %c0_18 = arith.constant 0 : index
    %c0_19 = arith.constant 0 : index
    %30 = vector.load %arg4[%c1_17, %c0_18, %c0_19] : memref<4x128x128xbf16, #tpu.memory_space<vmem>>, vector<1x128x128xbf16>
    %31 = vector.shape_cast %30 : vector<1x128x128xbf16> to vector<128x128xbf16>
    %cst_20 = arith.constant dense<0.000000e+00> : vector<64x128xf32>
    %32 = tpu.matmul %29, %31, %cst_20 {dimension_numbers = #tpu.dot_dimension_numbers<[1], [0], [0], [1], [0, 0, 1, 1], [], []>} : vector<64x128xbf16>, vector<128x128xbf16>, vector<64x128xf32> -> vector<64x128xf32>
    %c2 = arith.constant 2 : index
    %c0_21 = arith.constant 0 : index
    %33 = vector.load %arg5[%c2, %c0_21] : memref<5x128xf32, #tpu.memory_space<vmem>>, vector<1x128xf32>
    %34 = vector.broadcast %33 : vector<1x128xf32> to vector<64x128xf32>
    %35 = arith.addf %32, %34 : vector<64x128xf32>
    %cst_22 = arith.constant 0.000000e+00 : f32
    %36 = vector.broadcast %cst_22 : f32 to vector<64x128xf32>
    %37 = arith.maximumf %35, %36 : vector<64x128xf32>
    %38 = vector.shape_cast %37 : vector<64x128xf32> to vector<8x8x128xf32>
    %cst_23 = arith.constant dense<0.000000e+00> : vector<8x128xf32>
    %39 = vector.multi_reduction <add>, %38, %cst_23 [1] : vector<8x8x128xf32> to vector<8x128xf32>
    %cst_24 = arith.constant 1.250000e-01 : f32
    %40 = vector.broadcast %cst_24 : f32 to vector<8x128xf32>
    %41 = arith.mulf %39, %40 : vector<8x128xf32>
    %42 = arith.truncf %41 : vector<8x128xf32> to vector<8x128xbf16>
    %c2_25 = arith.constant 2 : index
    %c0_26 = arith.constant 0 : index
    %c0_27 = arith.constant 0 : index
    %43 = vector.load %arg4[%c2_25, %c0_26, %c0_27] : memref<4x128x128xbf16, #tpu.memory_space<vmem>>, vector<1x128x128xbf16>
    %44 = vector.shape_cast %43 : vector<1x128x128xbf16> to vector<128x128xbf16>
    %cst_28 = arith.constant dense<0.000000e+00> : vector<8x128xf32>
    %45 = tpu.matmul %42, %44, %cst_28 {dimension_numbers = #tpu.dot_dimension_numbers<[1], [0], [0], [1], [0, 0, 1, 1], [], []>} : vector<8x128xbf16>, vector<128x128xbf16>, vector<8x128xf32> -> vector<8x128xf32>
    %c3 = arith.constant 3 : index
    %c0_29 = arith.constant 0 : index
    %46 = vector.load %arg5[%c3, %c0_29] : memref<5x128xf32, #tpu.memory_space<vmem>>, vector<1x128xf32>
    %47 = vector.broadcast %46 : vector<1x128xf32> to vector<8x128xf32>
    %48 = arith.addf %45, %47 : vector<8x128xf32>
    %cst_30 = arith.constant 0.000000e+00 : f32
    %49 = vector.broadcast %cst_30 : f32 to vector<8x128xf32>
    %50 = arith.maximumf %48, %49 : vector<8x128xf32>
    %51 = arith.truncf %50 : vector<8x128xf32> to vector<8x128xbf16>
    %c3_31 = arith.constant 3 : index
    %c0_32 = arith.constant 0 : index
    %c0_33 = arith.constant 0 : index
    %52 = vector.load %arg4[%c3_31, %c0_32, %c0_33] : memref<4x128x128xbf16, #tpu.memory_space<vmem>>, vector<1x128x128xbf16>
    %53 = vector.shape_cast %52 : vector<1x128x128xbf16> to vector<128x128xbf16>
    %cst_34 = arith.constant dense<0.000000e+00> : vector<8x128xf32>
    %54 = tpu.matmul %51, %53, %cst_34 {dimension_numbers = #tpu.dot_dimension_numbers<[1], [0], [0], [1], [0, 0, 1, 1], [], []>} : vector<8x128xbf16>, vector<128x128xbf16>, vector<8x128xf32> -> vector<8x128xf32>
    %c4 = arith.constant 4 : index
    %c0_35 = arith.constant 0 : index
    %55 = vector.load %arg5[%c4, %c0_35] : memref<5x128xf32, #tpu.memory_space<vmem>>, vector<1x128xf32>
    %56 = vector.broadcast %55 : vector<1x128xf32> to vector<8x128xf32>
    %57 = arith.addf %54, %56 : vector<8x128xf32>
    %c0_36 = arith.constant 0 : index
    %c0_37 = arith.constant 0 : index
    %58 = vector.load %arg6[%c0_36, %c0_37] : memref<8x128xf32, #tpu.memory_space<vmem>>, vector<8x128xf32>
    tpu.vector_store %arg6[%c0_36, %c0_37], %57 {strides = array<i32>} : memref<8x128xf32, #tpu.memory_space<vmem>>, vector<8x128xf32>,
    return
  }
  func.func @transform_0(%arg0: i32) -> (i32, i32, i32) {
    %c0_i32 = arith.constant 0 : i32
    %c0_i32_0 = arith.constant 0 : i32
    %c0_i32_1 = arith.constant 0 : i32
    return %arg0, %c0_i32, %c0_i32_0 : i32, i32, i32
  }
  func.func @transform_1(%arg0: i32) -> (i32, i32, i32) {
    %c0_i32 = arith.constant 0 : i32
    %c0_i32_0 = arith.constant 0 : i32
    %c0_i32_1 = arith.constant 0 : i32
    return %arg0, %c0_i32, %c0_i32_0 : i32, i32, i32
  }
  func.func @transform_2(%arg0: i32) -> (i32, i32) {
    %c0_i32 = arith.constant 0 : i32
    %c0_i32_0 = arith.constant 0 : i32
    %c0_i32_1 = arith.constant 0 : i32
    return %c0_i32, %c0_i32_0 : i32, i32
  }
  func.func @transform_3(%arg0: i32) -> (i32, i32, i32) {
    %c0_i32 = arith.constant 0 : i32
    %c0_i32_0 = arith.constant 0 : i32
    %c0_i32_1 = arith.constant 0 : i32
    %c0_i32_2 = arith.constant 0 : i32
    return %c0_i32, %c0_i32_0, %c0_i32_1 : i32, i32, i32
  }
  func.func @transform_4(%arg0: i32) -> (i32, i32) {
    %c0_i32 = arith.constant 0 : i32
    %c0_i32_0 = arith.constant 0 : i32
    %c0_i32_1 = arith.constant 0 : i32
    return %c0_i32, %c0_i32_0 : i32, i32
  }
  func.func @transform_5(%arg0: i32) -> (i32, i32) {
    %c0_i32 = arith.constant 0 : i32
    %c0_i32_0 = arith.constant 0 : i32
    return %arg0, %c0_i32 : i32, i32
  }
}

</mosaic_0001>

<llo_original>
// kernel: tpu_custom_call.1
$region0: #{tpu_custom_call.1}
  #allocation0 [shape = 'u32[]', space=smem, size = 0x4, offset = 0x4, fixed_abs, tag = 'smem constant byte address 0x4 - core index']
  #allocation1 [shape = 'u32[144,128]{1,0:T(1,128)}', space=vmem, size = 0x12000, scoped, tag = 'internal scratch']
  %s0 = inlined_call_operand.vmem [shape: f32[16,8,1], index: 0, kind: input, shape index: {}]
  %s1 = inlined_call_operand.vmem [shape: f32[16,8,1], index: 1, kind: input, shape index: {}]
  %s2 = inlined_call_operand.vmem [shape: f32[2,128], index: 2, kind: input, shape index: {}]
  %s3 = inlined_call_operand.vmem [shape: bf16[4,128,128], index: 3, kind: input, shape index: {}]
  %s4 = inlined_call_operand.vmem [shape: f32[5,128], index: 4, kind: input, shape index: {}]
  %s5 = inlined_call_operand.hbm [shape: f32[16,128], index: 5, kind: output, shape index: {}]
  %s6 = sld [smem:[#allocation0]]
  $region53: #{tpu_custom_call.1} parent=0
    _
  %s8 = ssub.s32 1, %s6
  %s9 = scalar_select 0, %s8, %s6
  $region1: #{tpu_custom_call.1} parent=0
    #allocation2 [shape = 'u8[8192]{0}', space=vmem, size = 0x2000, scoped, tag = 'output window, operand 0']
    #allocation3 [shape = 's32[2]{0}', space=sflag, size = 0x8, scoped, tag = 'scoped memory for tpu_custom_call.1']
    %10 = vsyncpa [#allocation3], 0
    %s11 = scalar_lea.sflag [#allocation3], 1
    %12 = vsyncpa %s11, 0
    loop: start=0, step=1, limit=4
    $region2: #{tpu_custom_call.1} parent=1 // loop_pre_header
      _
    $region3: #{tpu_custom_call.1} parent=1 // loop_header
      %s14 = sphi 0, %s18
      %p15 = scmp.ge.s32.totalorder %s14, 4
      %s24 = sphi 0, %s26
      %s27 = sphi 0, %s24
      %s28 = sphi 0, %s27
      %s44 = sphi 0, %s28
      %s50 = sphi 0, %s52
      %s53 = sphi 0, %s50
      %s54 = sphi 0, %s53
      %s70 = sphi 0, %s54
      %s74 = sphi 0, %s74
      %s76 = sphi 0, %s74
      %s77 = sphi 0, %s76
      %s91 = sphi 0, %s77
      %s95 = sphi 0, %s95
      %s97 = sphi 0, %s95
      %s98 = sphi 0, %s97
      %s112 = sphi 0, %s98
      %s116 = sphi 0, %s116
      %s118 = sphi 0, %s116
      %s119 = sphi 0, %s118
      %s133 = sphi 0, %s119
      %s139 = sphi 0, %s141
      %s142 = sphi 0, %s139
      %s143 = sphi 0, %s142
      %s159 = sphi 0, %s143
    $region4: #{tpu_custom_call.1} parent=1 // loop_header_branch
      %17 = sbr.rel (%p15) target = $region8
    $region5: #{tpu_custom_call.1} parent=1 // loop_body
      %s19 = ssub.s32 %s14, 1
      %s20 = ssub.s32 %s14, 2
      %s21 = sadd.s32 %s14, 1
      %s22 = ssub.s32 %s14, %s21
      %p23 = scmp.eq.s32.totalorder %s22, 0
      %s25 = sadd.s32 %s24, 1
      %s26 = scalar_select %p23, %s24, %s25
      %p29 = pneg %p23
      %p30 = scmp.eq.s32.totalorder %s14, 1
      %p31 = por %p29, %p30
      %p32 = scmp.ne.s32.totalorder %s24, %s27
      %p33 = scmp.eq.s32.totalorder %s14, 0
      %p34 = por %p32, %p33
      %p35 = scmp.ne.s32.totalorder %s24, %s27
      %p36 = scmp.eq.s32.totalorder %s19, 1
      %p37 = por %p35, %p36
      %p38 = scmp.ne.s32.totalorder %s27, %s28
      %p39 = scmp.eq.s32.totalorder %s19, 0
      %p40 = por %p38, %p39
      %p41 = scmp.ne.s32.totalorder %s27, %s28
      %p42 = scmp.eq.s32.totalorder %s20, 1
      %p43 = por %p41, %p42
      %p45 = scmp.ne.s32.totalorder %s28, %s44
      %p46 = scmp.eq.s32.totalorder %s20, 0
      %p47 = por %p45, %p46
      %s48 = ssub.s32 %s14, %s21
      %p49 = scmp.eq.s32.totalorder %s48, 0
      %s51 = sadd.s32 %s50, 1
      %s52 = scalar_select %p49, %s50, %s51
      %p55 = pneg %p49
      %p56 = scmp.eq.s32.totalorder %s14, 1
      %p57 = por %p55, %p56
      %p58 = scmp.ne.s32.totalorder %s50, %s53
      %p59 = scmp.eq.s32.totalorder %s14, 0
      %p60 = por %p58, %p59
      %p61 = scmp.ne.s32.totalorder %s50, %s53
      %p62 = scmp.eq.s32.totalorder %s19, 1
      %p63 = por %p61, %p62
      %p64 = scmp.ne.s32.totalorder %s53, %s54
      %p65 = scmp.eq.s32.totalorder %s19, 0
      %p66 = por %p64, %p65
      %p67 = scmp.ne.s32.totalorder %s53, %s54
      %p68 = scmp.eq.s32.totalorder %s20, 1
      %p69 = por %p67, %p68
      %p71 = scmp.ne.s32.totalorder %s54, %s70
      %p72 = scmp.eq.s32.totalorder %s20, 0
      %p73 = por %p71, %p72
      %s75 = sadd.s32 %s74, 1
      %p78 = scmp.eq.s32.totalorder %s14, 1
      %p79 = scmp.ne.s32.totalorder %s74, %s76
      %p80 = scmp.eq.s32.totalorder %s14, 0
      %p81 = por %p79, %p80
      %p82 = scmp.ne.s32.totalorder %s74, %s76
      %p83 = scmp.eq.s32.totalorder %s19, 1
      %p84 = por %p82, %p83
      %p85 = scmp.ne.s32.totalorder %s76, %s77
      %p86 = scmp.eq.s32.totalorder %s19, 0
      %p87 = por %p85, %p86
      %p88 = scmp.ne.s32.totalorder %s76, %s77
      %p89 = scmp.eq.s32.totalorder %s20, 1
      %p90 = por %p88, %p89
      %p92 = scmp.ne.s32.totalorder %s77, %s91
      %p93 = scmp.eq.s32.totalorder %s20, 0
      %p94 = por %p92, %p93
      %s96 = sadd.s32 %s95, 1
      %p99 = scmp.eq.s32.totalorder %s14, 1
      %p100 = scmp.ne.s32.totalorder %s95, %s97
      %p101 = scmp.eq.s32.totalorder %s14, 0
      %p102 = por %p100, %p101
      %p103 = scmp.ne.s32.totalorder %s95, %s97
      %p104 = scmp.eq.s32.totalorder %s19, 1
      %p105 = por %p103, %p104
      %p106 = scmp.ne.s32.totalorder %s97, %s98
      %p107 = scmp.eq.s32.totalorder %s19, 0
      %p108 = por %p106, %p107
      %p109 = scmp.ne.s32.totalorder %s97, %s98
      %p110 = scmp.eq.s32.totalorder %s20, 1
      %p111 = por %p109, %p110
      %p113 = scmp.ne.s32.totalorder %s98, %s112
      %p114 = scmp.eq.s32.totalorder %s20, 0
      %p115 = por %p113, %p114
      %s117 = sadd.s32 %s116, 1
      %p120 = scmp.eq.s32.totalorder %s14, 1
      %p121 = scmp.ne.s32.totalorder %s116, %s118
      %p122 = scmp.eq.s32.totalorder %s14, 0
      %p123 = por %p121, %p122
      %p124 = scmp.ne.s32.totalorder %s116, %s118
      %p125 = scmp.eq.s32.totalorder %s19, 1
      %p126 = por %p124, %p125
      %p127 = scmp.ne.s32.totalorder %s118, %s119
      %p128 = scmp.eq.s32.totalorder %s19, 0
      %p129 = por %p127, %p128
      %p130 = scmp.ne.s32.totalorder %s118, %s119
      %p131 = scmp.eq.s32.totalorder %s20, 1
      %p132 = por %p130, %p131
      %p134 = scmp.ne.s32.totalorder %s119, %s133
      %p135 = scmp.eq.s32.totalorder %s20, 0
      %p136 = por %p134, %p135
      %s137 = ssub.s32 %s14, %s21
      %p138 = scmp.eq.s32.totalorder %s137, 0
      %s140 = sadd.s32 %s139, 1
      %s141 = scalar_select %p138, %s139, %s140
      %p144 = pneg %p138
      %p145 = scmp.eq.s32.totalorder %s14, 1
      %p146 = por %p144, %p145
      %p147 = scmp.ne.s32.totalorder %s139, %s142
      %p148 = scmp.eq.s32.totalorder %s14, 0
      %p149 = por %p147, %p148
      %p150 = scmp.ne.s32.totalorder %s139, %s142
      %p151 = scmp.eq.s32.totalorder %s19, 1
      %p152 = por %p150, %p151
      %p153 = scmp.ne.s32.totalorder %s142, %s143
      %p154 = scmp.eq.s32.totalorder %s19, 0
      %p155 = por %p153, %p154
      %p156 = scmp.ne.s32.totalorder %s142, %s143
      %p157 = scmp.eq.s32.totalorder %s20, 1
      %p158 = por %p156, %p157
      %p160 = scmp.ne.s32.totalorder %s143, %s159
      %p161 = scmp.eq.s32.totalorder %s20, 0
      %p162 = por %p160, %p161
      %p163 = scmp.le.s32.totalorder 1, %s14
      %p164 = scmp.lt.s32.totalorder %s14, 3
      %p165 = pnand %p163, %p164
      %p166 = pneg %p165
      // Predicated region
      $region9: #{tpu_custom_call.1} parent=5 // pred_check
        _
      $region10: #{tpu_custom_call.1} parent=5 // pred_check_branch
        %168 = sbr.rel (%p165) target = $region12
      $region11: #{tpu_custom_call.1} parent=5 // pred_region
        %s169 = ssub.s32 %s14, 1
        // Predicated region
        $region13: #{tpu_custom_call.1} parent=11 // pred_check
          %p170 = pneg %p87
        $region14: #{tpu_custom_call.1} parent=11 // pred_check_branch
          %172 = sbr.rel (%p170) target = $region16
        $region15: #{tpu_custom_call.1} parent=11 // pred_region
          _
        $region16: #{tpu_custom_call.1} parent=11 // pred_fallthru
          _
        // Predicated region
        $region17: #{tpu_custom_call.1} parent=11 // pred_check
          %p173 = pneg %p108
        $region18: #{tpu_custom_call.1} parent=11 // pred_check_branch
          %175 = sbr.rel (%p173) target = $region20
        $region19: #{tpu_custom_call.1} parent=11 // pred_region
          _
        $region20: #{tpu_custom_call.1} parent=11 // pred_fallthru
          _
        // Predicated region
        $region21: #{tpu_custom_call.1} parent=11 // pred_check
          %p176 = pneg %p129
        $region22: #{tpu_custom_call.1} parent=11 // pred_check_branch
          %178 = sbr.rel (%p176) target = $region24
        $region23: #{tpu_custom_call.1} parent=11 // pred_region
          _
        $region24: #{tpu_custom_call.1} parent=11 // pred_fallthru
          _
      $region12: #{tpu_custom_call.1} parent=5 // pred_fallthru
        _
      %p179 = scmp.lt.s32.totalorder %s14, 2
      // Predicated region
      $region25: #{tpu_custom_call.1} parent=5 // pred_check
        %p180 = pneg %p179
      $region26: #{tpu_custom_call.1} parent=5 // pred_check_branch
        %182 = sbr.rel (%p180) target = $region28
      $region27: #{tpu_custom_call.1} parent=5 // pred_region
        // Predicated region
        $region29: #{tpu_custom_call.1} parent=27 // pred_check
          %p183 = pneg %p34
        $region30: #{tpu_custom_call.1} parent=27 // pred_check_branch
          %185 = sbr.rel (%p183) target = $region32
        $region31: #{tpu_custom_call.1} parent=27 // pred_region
          %s186 = smul.u32 8, %s14
          %p187 = scmp.lt.s32.totalorder %s186, 15
          %s188 = scalar_select %p187, %s186, 15
          %s189 = smul.addr %s188, 8
          %s190 = scalar_lea.vmem %s0, %s189
          %s191 = smul.u32 8, %s14
        $region32: #{tpu_custom_call.1} parent=27 // pred_fallthru
          _
        // Predicated region
        $region33: #{tpu_custom_call.1} parent=27 // pred_check
          %p192 = pneg %p60
        $region34: #{tpu_custom_call.1} parent=27 // pred_check_branch
          %194 = sbr.rel (%p192) target = $region36
        $region35: #{tpu_custom_call.1} parent=27 // pred_region
          %s195 = smul.u32 8, %s14
          %p196 = scmp.lt.s32.totalorder %s195, 15
          %s197 = scalar_select %p196, %s195, 15
          %s198 = smul.addr %s197, 8
          %s199 = scalar_lea.vmem %s1, %s198
          %s200 = smul.u32 8, %s14
        $region36: #{tpu_custom_call.1} parent=27 // pred_fallthru
          _
      $region28: #{tpu_custom_call.1} parent=5 // pred_fallthru
        _
      %p201 = scmp.le.s32.totalorder 1, %s14
      %p202 = scmp.lt.s32.totalorder %s14, 3
      %p203 = pnand %p201, %p202
      %p204 = pneg %p203
      // Predicated region
      $region37: #{tpu_custom_call.1} parent=5 // pred_check
        _
      $region38: #{tpu_custom_call.1} parent=5 // pred_check_branch
        %206 = sbr.rel (%p203) target = $region40
      $region39: #{tpu_custom_call.1} parent=5 // pred_region
        %s207 = ssub.s32 %s14, 1
        %s208 = smul.u32 8, %s19
        %p209 = scmp.lt.s32.totalorder %s208, 15
        %s210 = scalar_select %p209, %s208, 15
        %s211 = smul.addr %s210, 8
        %s212 = scalar_lea.vmem %s0, %s211
        %p213 = pneg %p40
        %p214 = pneg %p37
        %s215 = smul.u32 8, %s19
        %p216 = scmp.lt.s32.totalorder %s215, 15
        %s217 = scalar_select %p216, %s215, 15
        %s218 = smul.addr %s217, 8
        %s219 = scalar_lea.vmem %s1, %s218
        %p220 = pneg %p66
        %p221 = pneg %p63
        %p222 = pneg %p87
        %p223 = pneg %p84
        %p224 = pneg %p108
        %p225 = pneg %p105
        %p226 = pneg %p129
        %p227 = pneg %p126
        %p228 = pneg %p155
        %p229 = pneg %p152
        %s230 = sand.u32 %s142, 1
        %s231 = scalar_lea.sflag [#allocation3], %s230
        %s232 = sand.u32 %s142, 1
        %s233 = smul.addr %s232, 8
        %s234 = scalar_lea.vmem [#allocation2], %s233
        %s235 = smul.u32 8, %s19
        %p236 = scmp.lt.s32.totalorder %s235, 15
        %s237 = scalar_select %p236, %s235, 15
        %s238 = smul.addr %s237, 8
        %s239 = scalar_lea.vmem %s0, %s238
        %s240 = smul.u32 8, %s19
        %s241 = smul.u32 8, %s19
        %p242 = scmp.lt.s32.totalorder %s241, 15
        %s243 = scalar_select %p242, %s241, 15
        %s244 = smul.addr %s243, 8
        %s245 = scalar_lea.vmem %s1, %s244
        %s246 = smul.u32 8, %s19
        %v248 = vld [vmem:[%s4] sm:$0x1]
        %v249 = vld [vmem:[%s239] sm:$0xff]
        %v250 = vld [vmem:[%s239 + $0x8] sm:$0xff]
        %v251 = vld [vmem:[%s239 + $0x10] sm:$0xff]
        %v252 = vld [vmem:[%s239 + $0x18] sm:$0xff]
        %v253 = vld [vmem:[%s239 + $0x20] sm:$0xff]
        %v254 = vld [vmem:[%s239 + $0x28] sm:$0xff]
        %v255 = vld [vmem:[%s239 + $0x30] sm:$0xff]
        %v256 = vld [vmem:[%s239 + $0x38] sm:$0xff]
        %v257 = vld [vmem:[%s245] sm:$0xff]
        %v258 = vld [vmem:[%s245 + $0x8] sm:$0xff]
        %v259 = vld [vmem:[%s245 + $0x10] sm:$0xff]
        %v260 = vld [vmem:[%s245 + $0x18] sm:$0xff]
        %v261 = vld [vmem:[%s245 + $0x20] sm:$0xff]
        %v262 = vld [vmem:[%s245 + $0x28] sm:$0xff]
        %v263 = vld [vmem:[%s245 + $0x30] sm:$0xff]
        %v264 = vld [vmem:[%s245 + $0x38] sm:$0xff]
        %v265 = vld [vmem:[%s2] sm:$0x1]
        %267 = vset.pattern.permute.xlu0 0
        %268 = vperm.xlu0 %267, %v249
        %v269 = vpop.permute.xlu0 %268
        %272 = vset.pattern.permute.xlu0 0
        %273 = vperm.xlu0 %272, %v250
        %v274 = vpop.permute.xlu0 %273
        %277 = vset.pattern.permute.xlu0 0
        %278 = vperm.xlu0 %277, %v251
        %v279 = vpop.permute.xlu0 %278
        %282 = vset.pattern.permute.xlu0 0
        %283 = vperm.xlu0 %282, %v252
        %v284 = vpop.permute.xlu0 %283
        %287 = vset.pattern.permute.xlu0 0
        %288 = vperm.xlu0 %287, %v253
        %v289 = vpop.permute.xlu0 %288
        %292 = vset.pattern.permute.xlu0 0
        %293 = vperm.xlu0 %292, %v254
        %v294 = vpop.permute.xlu0 %293
        %297 = vset.pattern.permute.xlu0 0
        %298 = vperm.xlu0 %297, %v255
        %v299 = vpop.permute.xlu0 %298
        %302 = vset.pattern.permute.xlu0 0
        %303 = vperm.xlu0 %302, %v256
        %v304 = vpop.permute.xlu0 %303
        %v306 = vlaneseq
        %v307 = vshrl.u32 %v306, 7
        %v308 = vsub.s32 0, %v307
        %v309 = vrot.slane %v265, %v308
        %v310 = vmul.f32 %v269, %v309
        %v311 = vmul.f32 %v274, %v309
        %v312 = vmul.f32 %v279, %v309
        %v313 = vmul.f32 %v284, %v309
        %v314 = vmul.f32 %v289, %v309
        %v315 = vmul.f32 %v294, %v309
        %v316 = vmul.f32 %v299, %v309
        %v317 = vmul.f32 %v304, %v309
        %v318 = vlaneseq
        %v319 = vshrl.u32 %v318, 7
        %v320 = vsub.s32 0, %v319
        %v321 = vrot.slane %v248, %v320
        %v322 = vadd.f32 %v321, %v310
        %v323 = vadd.f32 %v321, %v311
        %v324 = vadd.f32 %v321, %v312
        %v325 = vadd.f32 %v321, %v313
        %v326 = vadd.f32 %v321, %v314
        %v327 = vadd.f32 %v321, %v315
        %v328 = vadd.f32 %v321, %v316
        %v329 = vadd.f32 %v321, %v317
        %v330 = vld [vmem:[%s2 + $0x1] sm:$0x1]
        %332 = vset.pattern.permute.xlu0 0
        %333 = vperm.xlu0 %332, %v257
        %v334 = vpop.permute.xlu0 %333
        %337 = vset.pattern.permute.xlu0 0
        %338 = vperm.xlu0 %337, %v258
        %v339 = vpop.permute.xlu0 %338
        %342 = vset.pattern.permute.xlu0 0
        %343 = vperm.xlu0 %342, %v259
        %v344 = vpop.permute.xlu0 %343
        %347 = vset.pattern.permute.xlu0 0
        %348 = vperm.xlu0 %347, %v260
        %v349 = vpop.permute.xlu0 %348
        %352 = vset.pattern.permute.xlu0 0
        %353 = vperm.xlu0 %352, %v261
        %v354 = vpop.permute.xlu0 %353
        %357 = vset.pattern.permute.xlu0 0
        %358 = vperm.xlu0 %357, %v262
        %v359 = vpop.permute.xlu0 %358
        %362 = vset.pattern.permute.xlu0 0
        %363 = vperm.xlu0 %362, %v263
        %v364 = vpop.permute.xlu0 %363
        %367 = vset.pattern.permute.xlu0 0
        %368 = vperm.xlu0 %367, %v264
        %v369 = vpop.permute.xlu0 %368
        %v371 = vlaneseq
        %v372 = vshrl.u32 %v371, 7
        %v373 = vsub.s32 0, %v372
        %v374 = vrot.slane %v330, %v373
        %v375 = vmul.f32 %v334, %v374
        %v376 = vmul.f32 %v339, %v374
        %v377 = vmul.f32 %v344, %v374
        %v378 = vmul.f32 %v349, %v374
        %v379 = vmul.f32 %v354, %v374
        %v380 = vmul.f32 %v359, %v374
        %v381 = vmul.f32 %v364, %v374
        %v382 = vmul.f32 %v369, %v374
        %v383 = vadd.f32 %v322, %v375
        %v384 = vadd.f32 %v323, %v376
        %v385 = vadd.f32 %v324, %v377
        %v386 = vadd.f32 %v325, %v378
        %v387 = vadd.f32 %v326, %v379
        %v388 = vadd.f32 %v327, %v380
        %v389 = vadd.f32 %v328, %v381
        %v390 = vadd.f32 %v329, %v382
        %v391 = vmax.f32 %v383, 0.0
        %v392 = vmax.f32 %v384, 0.0
        %v393 = vmax.f32 %v385, 0.0
        %v394 = vmax.f32 %v386, 0.0
        %v395 = vmax.f32 %v387, 0.0
        %v396 = vmax.f32 %v388, 0.0
        %v397 = vmax.f32 %v389, 0.0
        %v398 = vmax.f32 %v390, 0.0
        %v399 = vpack.c.bf16 %v392, %v391
        %v400 = vpack.c.bf16 %v394, %v393
        %v401 = vpack.c.bf16 %v396, %v395
        %v402 = vpack.c.bf16 %v398, %v397
        %v403 = vld [vmem:[%s3] sm:$0xf]
        %v404 = vld [vmem:[%s3 + $0x4] sm:$0xf]
        %v405 = vld [vmem:[%s3 + $0x8] sm:$0xf]
        %v406 = vld [vmem:[%s3 + $0xc] sm:$0xf]
        %v407 = vld [vmem:[%s3 + $0x10] sm:$0xf]
        %v408 = vld [vmem:[%s3 + $0x14] sm:$0xf]
        %v409 = vld [vmem:[%s3 + $0x18] sm:$0xf]
        %v410 = vld [vmem:[%s3 + $0x1c] sm:$0xf]
        %v411 = vld [vmem:[%s3 + $0x20] sm:$0xf]
        %v412 = vld [vmem:[%s3 + $0x24] sm:$0xf]
        %v413 = vld [vmem:[%s3 + $0x28] sm:$0xf]
        %v414 = vld [vmem:[%s3 + $0x2c] sm:$0xf]
        %v415 = vld [vmem:[%s3 + $0x30] sm:$0xf]
        %v416 = vld [vmem:[%s3 + $0x34] sm:$0xf]
        %v417 = vld [vmem:[%s3 + $0x38] sm:$0xf]
        %v418 = vld [vmem:[%s3 + $0x3c] sm:$0xf]
        %v419 = vld [vmem:[%s4 + $0x1] sm:$0x1]
        %v420 = vlaneseq
        %v421 = vshrl.u32 %v420, 7
        %v422 = vsub.s32 0, %v421
        %v423 = vrot.slane %v419, %v422
        %v440 = vunpack.c.l.b16 %v403
        %v441 = vunpack.c.l.b16 %v404
        %v442 = vunpack.c.l.b16 %v405
        %v443 = vunpack.c.l.b16 %v406
        %v444 = vunpack.c.l.b16 %v407
        %v445 = vunpack.c.l.b16 %v408
        %v446 = vunpack.c.l.b16 %v409
        %v447 = vunpack.c.l.b16 %v410
        %v448 = vunpack.c.l.b16 %v411
        %v449 = vunpack.c.l.b16 %v412
        %v450 = vunpack.c.l.b16 %v413
        %v451 = vunpack.c.l.b16 %v414
        %v452 = vunpack.c.l.b16 %v415
        %v453 = vunpack.c.l.b16 %v416
        %v454 = vunpack.c.l.b16 %v417
        %v455 = vunpack.c.l.b16 %v418
        %v456 = vpack.c.b16 %v441, %v440
        %v457 = vpack.c.b16 %v443, %v442
        %v458 = vpack.c.b16 %v445, %v444
        %v459 = vpack.c.b16 %v447, %v446
        %v460 = vpack.c.b16 %v449, %v448
        %v461 = vpack.c.b16 %v451, %v450
        %v462 = vpack.c.b16 %v453, %v452
        %v463 = vpack.c.b16 %v455, %v454
        %472 = vmatprep.subr.bf16.mxu0 0
        %473 = vmatpush1.bf16.msra.mxu0 %v463
        %474 = vmatprep.subr.bf16.mxu0 0
        %475 = vmatpush1.bf16.msra.mxu0 %v462
        %476 = vmatprep.subr.bf16.mxu0 0
        %477 = vmatpush1.bf16.msra.mxu0 %v461
        %478 = vmatprep.subr.bf16.mxu0 0
        %479 = vmatpush1.bf16.msra.mxu0 %v460
        %480 = vmatprep.subr.bf16.mxu0 0
        %481 = vmatpush1.bf16.msra.mxu0 %v459
        %482 = vmatprep.subr.bf16.mxu0 0
        %483 = vmatpush1.bf16.msra.mxu0 %v458
        %484 = vmatprep.subr.bf16.mxu0 0
        %485 = vmatpush1.bf16.msra.mxu0 %v457
        %486 = vmatprep.subr.bf16.mxu0 0
        %487 = vmatpush1.bf16.msra.mxu0 %v456
        %488 = vmatprep.subr.bf16.mxu0 0
        %489 = vmatpush2.bf16.msra.mxu0 0
        %490 = vmatprep.subr.bf16.mxu0 0
        %491 = vmatpush2.bf16.msra.mxu0 0
        %492 = vmatprep.subr.bf16.mxu0 0
        %493 = vmatpush2.bf16.msra.mxu0 0
        %494 = vmatprep.subr.bf16.mxu0 0
        %495 = vmatpush2.bf16.msra.mxu0 0
        %496 = vmatprep.subr.bf16.mxu0 0
        %497 = vmatpush2.bf16.msra.mxu0 0
        %498 = vmatprep.subr.bf16.mxu0 0
        %499 = vmatpush2.bf16.msra.mxu0 0
        %500 = vmatprep.subr.bf16.mxu0 0
        %501 = vmatpush2.bf16.msra.mxu0 0
        %502 = vmatprep.subr.bf16.mxu0 0
        %503 = vmatpush2.bf16.msra.mxu0 0
        %504 = vmatprep.mubr.bf16.mxu0 0
        %505 = vmatmul.mubr.bf16.gmra.mxu0 %v399
        %v506 = vpop.f32.mrf.mxu0
        %v507 = vadd.f32 %v423, %v506
        %v508 = vpop.f32.mrf.mxu0
        %v509 = vpop.f32.mrf.mxu0
        %v510 = vadd.f32 %v423, %v509
        %v511 = vpop.f32.mrf.mxu0
        %512 = vmatprep.mubr.bf16.mxu0 0
        %513 = vmatmul.mubr.bf16.gmra.mxu0 %v400
        %v514 = vpop.f32.mrf.mxu0
        %v515 = vadd.f32 %v423, %v514
        %v516 = vpop.f32.mrf.mxu0
        %v517 = vpop.f32.mrf.mxu0
        %v518 = vadd.f32 %v423, %v517
        %v519 = vpop.f32.mrf.mxu0
        %520 = vmatprep.mubr.bf16.mxu0 0
        %521 = vmatmul.mubr.bf16.gmra.mxu0 %v401
        %v522 = vpop.f32.mrf.mxu0
        %v523 = vadd.f32 %v423, %v522
        %v524 = vpop.f32.mrf.mxu0
        %v525 = vpop.f32.mrf.mxu0
        %v526 = vadd.f32 %v423, %v525
        %v527 = vpop.f32.mrf.mxu0
        %528 = vmatprep.mubr.bf16.mxu0 0
        %529 = vmatmul.mubr.bf16.gmra.mxu0 %v402
        %v530 = vpop.f32.mrf.mxu0
        %v531 = vadd.f32 %v423, %v530
        %v532 = vpop.f32.mrf.mxu0
        %v533 = vpop.f32.mrf.mxu0
        %v534 = vadd.f32 %v423, %v533
        %v535 = vpop.f32.mrf.mxu0
        %536 = vdwg.mxu0
        %v537 = vmax.f32 %v507, 0.0
        %v538 = vmax.f32 %v510, 0.0
        %v539 = vmax.f32 %v515, 0.0
        %v540 = vmax.f32 %v518, 0.0
        %v541 = vmax.f32 %v523, 0.0
        %v542 = vmax.f32 %v526, 0.0
        %v543 = vmax.f32 %v531, 0.0
        %v544 = vmax.f32 %v534, 0.0
        %v545 = vpack.c.bf16 %v538, %v537
        %v546 = vpack.c.bf16 %v540, %v539
        %v547 = vpack.c.bf16 %v542, %v541
        %v548 = vpack.c.bf16 %v544, %v543
        %s549 = scalar_lea.vmem %s3, 64
        %v550 = vld [vmem:[%s549] sm:$0xf]
        %v551 = vld [vmem:[%s549 + $0x4] sm:$0xf]
        %v552 = vld [vmem:[%s549 + $0x8] sm:$0xf]
        %v553 = vld [vmem:[%s549 + $0xc] sm:$0xf]
        %v554 = vld [vmem:[%s549 + $0x10] sm:$0xf]
        %v555 = vld [vmem:[%s549 + $0x14] sm:$0xf]
        %v556 = vld [vmem:[%s549 + $0x18] sm:$0xf]
        %v557 = vld [vmem:[%s549 + $0x1c] sm:$0xf]
        %v558 = vld [vmem:[%s549 + $0x20] sm:$0xf]
        %v559 = vld [vmem:[%s549 + $0x24] sm:$0xf]
        %v560 = vld [vmem:[%s549 + $0x28] sm:$0xf]
        %v561 = vld [vmem:[%s549 + $0x2c] sm:$0xf]
        %v562 = vld [vmem:[%s549 + $0x30] sm:$0xf]
        %v563 = vld [vmem:[%s549 + $0x34] sm:$0xf]
        %v564 = vld [vmem:[%s549 + $0x38] sm:$0xf]
        %v565 = vld [vmem:[%s549 + $0x3c] sm:$0xf]
        %v566 = vld [vmem:[%s4 + $0x2] sm:$0x1]
        %v567 = vlaneseq
        %v568 = vshrl.u32 %v567, 7
        %v569 = vsub.s32 0, %v568
        %v570 = vrot.slane %v566, %v569
        %v587 = vunpack.c.l.b16 %v550
        %v588 = vunpack.c.l.b16 %v551
        %v589 = vunpack.c.l.b16 %v552
        %v590 = vunpack.c.l.b16 %v553
        %v591 = vunpack.c.l.b16 %v554
        %v592 = vunpack.c.l.b16 %v555
        %v593 = vunpack.c.l.b16 %v556
        %v594 = vunpack.c.l.b16 %v557
        %v595 = vunpack.c.l.b16 %v558
        %v596 = vunpack.c.l.b16 %v559
        %v597 = vunpack.c.l.b16 %v560
        %v598 = vunpack.c.l.b16 %v561
        %v599 = vunpack.c.l.b16 %v562
        %v600 = vunpack.c.l.b16 %v563
        %v601 = vunpack.c.l.b16 %v564
        %v602 = vunpack.c.l.b16 %v565
        %v603 = vpack.c.b16 %v588, %v587
        %v604 = vpack.c.b16 %v590, %v589
        %v605 = vpack.c.b16 %v592, %v591
        %v606 = vpack.c.b16 %v594, %v593
        %v607 = vpack.c.b16 %v596, %v595
        %v608 = vpack.c.b16 %v598, %v597
        %v609 = vpack.c.b16 %v600, %v599
        %v610 = vpack.c.b16 %v602, %v601
        %619 = vmatprep.subr.bf16.mxu0 0
        %620 = vmatpush1.bf16.msra.mxu0 %v610
        %621 = vmatprep.subr.bf16.mxu0 0
        %622 = vmatpush1.bf16.msra.mxu0 %v609
        %623 = vmatprep.subr.bf16.mxu0 0
        %624 = vmatpush1.bf16.msra.mxu0 %v608
        %625 = vmatprep.subr.bf16.mxu0 0
        %626 = vmatpush1.bf16.msra.mxu0 %v607
        %627 = vmatprep.subr.bf16.mxu0 0
        %628 = vmatpush1.bf16.msra.mxu0 %v606
        %629 = vmatprep.subr.bf16.mxu0 0
        %630 = vmatpush1.bf16.msra.mxu0 %v605
        %631 = vmatprep.subr.bf16.mxu0 0
        %632 = vmatpush1.bf16.msra.mxu0 %v604
        %633 = vmatprep.subr.bf16.mxu0 0
        %634 = vmatpush1.bf16.msra.mxu0 %v603
        %635 = vmatprep.subr.bf16.mxu0 0
        %636 = vmatpush2.bf16.msra.mxu0 0
        %637 = vmatprep.subr.bf16.mxu0 0
        %638 = vmatpush2.bf16.msra.mxu0 0
        %639 = vmatprep.subr.bf16.mxu0 0
        %640 = vmatpush2.bf16.msra.mxu0 0
        %641 = vmatprep.subr.bf16.mxu0 0
        %642 = vmatpush2.bf16.msra.mxu0 0
        %643 = vmatprep.subr.bf16.mxu0 0
        %644 = vmatpush2.bf16.msra.mxu0 0
        %645 = vmatprep.subr.bf16.mxu0 0
        %646 = vmatpush2.bf16.msra.mxu0 0
        %647 = vmatprep.subr.bf16.mxu0 0
        %648 = vmatpush2.bf16.msra.mxu0 0
        %649 = vmatprep.subr.bf16.mxu0 0
        %650 = vmatpush2.bf16.msra.mxu0 0
        %651 = vmatprep.mubr.bf16.mxu0 0
        %652 = vmatmul.mubr.bf16.gmra.mxu0 %v545
        %v653 = vpop.f32.mrf.mxu0
        %v654 = vadd.f32 %v570, %v653
        %v655 = vpop.f32.mrf.mxu0
        %v656 = vpop.f32.mrf.mxu0
        %v657 = vadd.f32 %v570, %v656
        %v658 = vpop.f32.mrf.mxu0
        %659 = vmatprep.mubr.bf16.mxu0 0
        %660 = vmatmul.mubr.bf16.gmra.mxu0 %v546
        %v661 = vpop.f32.mrf.mxu0
        %v662 = vadd.f32 %v570, %v661
        %v663 = vpop.f32.mrf.mxu0
        %v664 = vpop.f32.mrf.mxu0
        %v665 = vadd.f32 %v570, %v664
        %v666 = vpop.f32.mrf.mxu0
        %667 = vmatprep.mubr.bf16.mxu0 0
        %668 = vmatmul.mubr.bf16.gmra.mxu0 %v547
        %v669 = vpop.f32.mrf.mxu0
        %v670 = vadd.f32 %v570, %v669
        %v671 = vpop.f32.mrf.mxu0
        %v672 = vpop.f32.mrf.mxu0
        %v673 = vadd.f32 %v570, %v672
        %v674 = vpop.f32.mrf.mxu0
        %675 = vmatprep.mubr.bf16.mxu0 0
        %676 = vmatmul.mubr.bf16.gmra.mxu0 %v548
        %v677 = vpop.f32.mrf.mxu0
        %v678 = vadd.f32 %v570, %v677
        %v679 = vpop.f32.mrf.mxu0
        %v680 = vpop.f32.mrf.mxu0
        %v681 = vadd.f32 %v570, %v680
        %v682 = vpop.f32.mrf.mxu0
        %683 = vdwg.mxu0
        %v684 = vmax.f32 %v654, 0.0
        %v685 = vmax.f32 %v657, 0.0
        %v686 = vmax.f32 %v662, 0.0
        %v687 = vmax.f32 %v665, 0.0
        %v688 = vmax.f32 %v670, 0.0
        %v689 = vmax.f32 %v673, 0.0
        %v690 = vmax.f32 %v678, 0.0
        %v691 = vmax.f32 %v681, 0.0
        %v692 = vrot.slane %v684, 4
        %v693 = vadd.f32 %v684, %v692
        %v694 = vrot.slane %v693, 2
        %v695 = vadd.f32 %v693, %v694
        %v696 = vrot.slane %v695, 1
        %v697 = vadd.f32 %v695, %v696
        %v698 = vrot.slane %v685, 4
        %v699 = vadd.f32 %v685, %v698
        %v700 = vrot.slane %v699, 2
        %v701 = vadd.f32 %v699, %v700
        %v702 = vrot.slane %v701, 1
        %v703 = vadd.f32 %v701, %v702
        %v704 = vrot.slane %v686, 4
        %v705 = vadd.f32 %v686, %v704
        %v706 = vrot.slane %v705, 2
        %v707 = vadd.f32 %v705, %v706
        %v708 = vrot.slane %v707, 1
        %v709 = vadd.f32 %v707, %v708
        %v710 = vrot.slane %v687, 4
        %v711 = vadd.f32 %v687, %v710
        %v712 = vrot.slane %v711, 2
        %v713 = vadd.f32 %v711, %v712
        %v714 = vrot.slane %v713, 1
        %v715 = vadd.f32 %v713, %v714
        %v716 = vrot.slane %v688, 4
        %v717 = vadd.f32 %v688, %v716
        %v718 = vrot.slane %v717, 2
        %v719 = vadd.f32 %v717, %v718
        %v720 = vrot.slane %v719, 1
        %v721 = vadd.f32 %v719, %v720
        %v722 = vrot.slane %v689, 4
        %v723 = vadd.f32 %v689, %v722
        %v724 = vrot.slane %v723, 2
        %v725 = vadd.f32 %v723, %v724
        %v726 = vrot.slane %v725, 1
        %v727 = vadd.f32 %v725, %v726
        %v728 = vrot.slane %v690, 4
        %v729 = vadd.f32 %v690, %v728
        %v730 = vrot.slane %v729, 2
        %v731 = vadd.f32 %v729, %v730
        %v732 = vrot.slane %v731, 1
        %v733 = vadd.f32 %v731, %v732
        %v734 = vrot.slane %v691, 4
        %v735 = vadd.f32 %v691, %v734
        %v736 = vrot.slane %v735, 2
        %v737 = vadd.f32 %v735, %v736
        %v738 = vrot.slane %v737, 1
        %v739 = vadd.f32 %v737, %v738
        %v740 = vmul.f32 %v697, 0.125
        %v741 = vmul.f32 %v703, 0.125
        %v742 = vmul.f32 %v709, 0.125
        %v743 = vmul.f32 %v715, 0.125
        %v744 = vmul.f32 %v721, 0.125
        %v745 = vmul.f32 %v727, 0.125
        %v746 = vmul.f32 %v733, 0.125
        %v747 = vmul.f32 %v739, 0.125
        %v748 = vpack.c.bf16 %v740, %v740
        %v749 = vpack.c.bf16 %v741, %v741
        %v750 = vpack.c.bf16 %v742, %v742
        %v751 = vpack.c.bf16 %v743, %v743
        %v752 = vpack.c.bf16 %v744, %v744
        %v753 = vpack.c.bf16 %v745, %v745
        %v754 = vpack.c.bf16 %v746, %v746
        %v755 = vpack.c.bf16 %v747, %v747
        %s756 = scalar_lea.vmem %s3, 128
        %v757 = vld [vmem:[%s756] sm:$0xf]
        %v758 = vld [vmem:[%s756 + $0x4] sm:$0xf]
        %v759 = vld [vmem:[%s756 + $0x8] sm:$0xf]
        %v760 = vld [vmem:[%s756 + $0xc] sm:$0xf]
        %v761 = vld [vmem:[%s756 + $0x10] sm:$0xf]
        %v762 = vld [vmem:[%s756 + $0x14] sm:$0xf]
        %v763 = vld [vmem:[%s756 + $0x18] sm:$0xf]
        %v764 = vld [vmem:[%s756 + $0x1c] sm:$0xf]
        %v765 = vld [vmem:[%s756 + $0x20] sm:$0xf]
        %v766 = vld [vmem:[%s756 + $0x24] sm:$0xf]
        %v767 = vld [vmem:[%s756 + $0x28] sm:$0xf]
        %v768 = vld [vmem:[%s756 + $0x2c] sm:$0xf]
        %v769 = vld [vmem:[%s756 + $0x30] sm:$0xf]
        %v770 = vld [vmem:[%s756 + $0x34] sm:$0xf]
        %v771 = vld [vmem:[%s756 + $0x38] sm:$0xf]
        %v772 = vld [vmem:[%s756 + $0x3c] sm:$0xf]
        %v773 = vld [vmem:[%s4 + $0x3] sm:$0x1]
        %v774 = vlaneseq
        %v775 = vshrl.u32 %v774, 7
        %v776 = vsub.s32 0, %v775
        %v777 = vrot.slane %v773, %v776
        %v786 = vunpack.c.l.b16 %v748
        %v787 = vunpack.c.l.b16 %v749
        %v788 = vunpack.c.l.b16 %v750
        %v789 = vunpack.c.l.b16 %v751
        %v790 = vunpack.c.l.b16 %v752
        %v791 = vunpack.c.l.b16 %v753
        %v792 = vunpack.c.l.b16 %v754
        %v793 = vunpack.c.l.b16 %v755
        %vm794 = vcmask 1041409
        %v795 = vsel %vm794, %v787, %v786
        %vm796 = vcmask 1042434
        %v797 = vsel %vm796, %v788, %v795
        %vm798 = vcmask 1043459
        %v799 = vsel %vm798, %v789, %v797
        %vm800 = vcmask 1044484
        %v801 = vsel %vm800, %v790, %v799
        %vm802 = vcmask 1045509
        %v803 = vsel %vm802, %v791, %v801
        %vm804 = vcmask 1046534
        %v805 = vsel %vm804, %v792, %v803
        %vm806 = vcmask 1047559
        %v807 = vsel %vm806, %v793, %v805
        %v808 = vpack.c.b16 %v807, %v807
        %v826 = vunpack.c.l.b16 %v757
        %v827 = vunpack.c.l.b16 %v758
        %v828 = vunpack.c.l.b16 %v759
        %v829 = vunpack.c.l.b16 %v760
        %v830 = vunpack.c.l.b16 %v761
        %v831 = vunpack.c.l.b16 %v762
        %v832 = vunpack.c.l.b16 %v763
        %v833 = vunpack.c.l.b16 %v764
        %v834 = vunpack.c.l.b16 %v765
        %v835 = vunpack.c.l.b16 %v766
        %v836 = vunpack.c.l.b16 %v767
        %v837 = vunpack.c.l.b16 %v768
        %v838 = vunpack.c.l.b16 %v769
        %v839 = vunpack.c.l.b16 %v770
        %v840 = vunpack.c.l.b16 %v771
        %v841 = vunpack.c.l.b16 %v772
        %v842 = vpack.c.b16 %v827, %v826
        %v843 = vpack.c.b16 %v829, %v828
        %v844 = vpack.c.b16 %v831, %v830
        %v845 = vpack.c.b16 %v833, %v832
        %v846 = vpack.c.b16 %v835, %v834
        %v847 = vpack.c.b16 %v837, %v836
        %v848 = vpack.c.b16 %v839, %v838
        %v849 = vpack.c.b16 %v841, %v840
        %858 = vmatprep.subr.bf16.mxu0 0
        %859 = vmatpush1.bf16.msra.mxu0 %v849
        %860 = vmatprep.subr.bf16.mxu0 0
        %861 = vmatpush1.bf16.msra.mxu0 %v848
        %862 = vmatprep.subr.bf16.mxu0 0
        %863 = vmatpush1.bf16.msra.mxu0 %v847
        %864 = vmatprep.subr.bf16.mxu0 0
        %865 = vmatpush1.bf16.msra.mxu0 %v846
        %866 = vmatprep.subr.bf16.mxu0 0
        %867 = vmatpush1.bf16.msra.mxu0 %v845
        %868 = vmatprep.subr.bf16.mxu0 0
        %869 = vmatpush1.bf16.msra.mxu0 %v844
        %870 = vmatprep.subr.bf16.mxu0 0
        %871 = vmatpush1.bf16.msra.mxu0 %v843
        %872 = vmatprep.subr.bf16.mxu0 0
        %873 = vmatpush1.bf16.msra.mxu0 %v842
        %874 = vmatprep.subr.bf16.mxu0 0
        %875 = vmatpush2.bf16.msra.mxu0 0
        %876 = vmatprep.subr.bf16.mxu0 0
        %877 = vmatpush2.bf16.msra.mxu0 0
        %878 = vmatprep.subr.bf16.mxu0 0
        %879 = vmatpush2.bf16.msra.mxu0 0
        %880 = vmatprep.subr.bf16.mxu0 0
        %881 = vmatpush2.bf16.msra.mxu0 0
        %882 = vmatprep.subr.bf16.mxu0 0
        %883 = vmatpush2.bf16.msra.mxu0 0
        %884 = vmatprep.subr.bf16.mxu0 0
        %885 = vmatpush2.bf16.msra.mxu0 0
        %886 = vmatprep.subr.bf16.mxu0 0
        %887 = vmatpush2.bf16.msra.mxu0 0
        %888 = vmatprep.subr.bf16.mxu0 0
        %889 = vmatpush2.bf16.msra.mxu0 0
        %890 = vmatprep.mubr.bf16.mxu0 0
        %891 = vmatmul.mubr.bf16.gmra.mxu0 %v808
        %v892 = vpop.f32.mrf.mxu0
        %v893 = vadd.f32 %v777, %v892
        %v894 = vpop.f32.mrf.mxu0
        %v895 = vpop.f32.mrf.mxu0
        %v896 = vpop.f32.mrf.mxu0
        %897 = vdwg.mxu0
        %v898 = vmax.f32 %v893, 0.0
        %v899 = vpack.c.bf16 %v898, %v898
        %s900 = scalar_lea.vmem %s3, 192
        %v901 = vld [vmem:[%s900] sm:$0xf]
        %v902 = vld [vmem:[%s900 + $0x4] sm:$0xf]
        %v903 = vld [vmem:[%s900 + $0x8] sm:$0xf]
        %v904 = vld [vmem:[%s900 + $0xc] sm:$0xf]
        %v905 = vld [vmem:[%s900 + $0x10] sm:$0xf]
        %v906 = vld [vmem:[%s900 + $0x14] sm:$0xf]
        %v907 = vld [vmem:[%s900 + $0x18] sm:$0xf]
        %v908 = vld [vmem:[%s900 + $0x1c] sm:$0xf]
        %v909 = vld [vmem:[%s900 + $0x20] sm:$0xf]
        %v910 = vld [vmem:[%s900 + $0x24] sm:$0xf]
        %v911 = vld [vmem:[%s900 + $0x28] sm:$0xf]
        %v912 = vld [vmem:[%s900 + $0x2c] sm:$0xf]
        %v913 = vld [vmem:[%s900 + $0x30] sm:$0xf]
        %v914 = vld [vmem:[%s900 + $0x34] sm:$0xf]
        %v915 = vld [vmem:[%s900 + $0x38] sm:$0xf]
        %v916 = vld [vmem:[%s900 + $0x3c] sm:$0xf]
        %v917 = vld [vmem:[%s4 + $0x4] sm:$0x1]
        %v918 = vlaneseq
        %v919 = vshrl.u32 %v918, 7
        %v920 = vsub.s32 0, %v919
        %v921 = vrot.slane %v917, %v920
        %v938 = vunpack.c.l.b16 %v901
        %v939 = vunpack.c.l.b16 %v902
        %v940 = vunpack.c.l.b16 %v903
        %v941 = vunpack.c.l.b16 %v904
        %v942 = vunpack.c.l.b16 %v905
        %v943 = vunpack.c.l.b16 %v906
        %v944 = vunpack.c.l.b16 %v907
        %v945 = vunpack.c.l.b16 %v908
        %v946 = vunpack.c.l.b16 %v909
        %v947 = vunpack.c.l.b16 %v910
        %v948 = vunpack.c.l.b16 %v911
        %v949 = vunpack.c.l.b16 %v912
        %v950 = vunpack.c.l.b16 %v913
        %v951 = vunpack.c.l.b16 %v914
        %v952 = vunpack.c.l.b16 %v915
        %v953 = vunpack.c.l.b16 %v916
        %v954 = vpack.c.b16 %v939, %v938
        %v955 = vpack.c.b16 %v941, %v940
        %v956 = vpack.c.b16 %v943, %v942
        %v957 = vpack.c.b16 %v945, %v944
        %v958 = vpack.c.b16 %v947, %v946
        %v959 = vpack.c.b16 %v949, %v948
        %v960 = vpack.c.b16 %v951, %v950
        %v961 = vpack.c.b16 %v953, %v952
        %970 = vmatprep.subr.bf16.mxu0 0
        %971 = vmatpush1.bf16.msra.mxu0 %v961
        %972 = vmatprep.subr.bf16.mxu0 0
        %973 = vmatpush1.bf16.msra.mxu0 %v960
        %974 = vmatprep.subr.bf16.mxu0 0
        %975 = vmatpush1.bf16.msra.mxu0 %v959
        %976 = vmatprep.subr.bf16.mxu0 0
        %977 = vmatpush1.bf16.msra.mxu0 %v958
        %978 = vmatprep.subr.bf16.mxu0 0
        %979 = vmatpush1.bf16.msra.mxu0 %v957
        %980 = vmatprep.subr.bf16.mxu0 0
        %981 = vmatpush1.bf16.msra.mxu0 %v956
        %982 = vmatprep.subr.bf16.mxu0 0
        %983 = vmatpush1.bf16.msra.mxu0 %v955
        %984 = vmatprep.subr.bf16.mxu0 0
        %985 = vmatpush1.bf16.msra.mxu0 %v954
        %986 = vmatprep.subr.bf16.mxu0 0
        %987 = vmatpush2.bf16.msra.mxu0 0
        %988 = vmatprep.subr.bf16.mxu0 0
        %989 = vmatpush2.bf16.msra.mxu0 0
        %990 = vmatprep.subr.bf16.mxu0 0
        %991 = vmatpush2.bf16.msra.mxu0 0
        %992 = vmatprep.subr.bf16.mxu0 0
        %993 = vmatpush2.bf16.msra.mxu0 0
        %994 = vmatprep.subr.bf16.mxu0 0
        %995 = vmatpush2.bf16.msra.mxu0 0
        %996 = vmatprep.subr.bf16.mxu0 0
        %997 = vmatpush2.bf16.msra.mxu0 0
        %998 = vmatprep.subr.bf16.mxu0 0
        %999 = vmatpush2.bf16.msra.mxu0 0
        %1000 = vmatprep.subr.bf16.mxu0 0
        %1001 = vmatpush2.bf16.msra.mxu0 0
        %1002 = vmatprep.mubr.bf16.mxu0 0
        %1003 = vmatmul.mubr.bf16.gmra.mxu0 %v899
        %v1004 = vpop.f32.mrf.mxu0
        %v1005 = vadd.f32 %v921, %v1004
        %v1006 = vpop.f32.mrf.mxu0
        %v1007 = vpop.f32.mrf.mxu0
        %v1008 = vpop.f32.mrf.mxu0
        %1009 = vdwg.mxu0
        %1010 = vst [vmem:[%s234] sm:$0xff] %v1005
        %s1011 = sand.u32 %s142, 1
        %s1012 = scalar_lea.sflag [#allocation3], %s1011
        %s1013 = sand.u32 %s142, 1
        %s1014 = smul.addr %s1013, 8
        %s1015 = scalar_lea.vmem [#allocation2], %s1014
        // Predicated region
        $region41: #{tpu_custom_call.1} parent=39 // pred_check
          %p1016 = pneg %p152
        $region42: #{tpu_custom_call.1} parent=39 // pred_check_branch
          %1018 = sbr.rel (%p1016) target = $region44
        $region43: #{tpu_custom_call.1} parent=39 // pred_region
          %s1020 = ssub.s32 128, 128
          %1021 = vsyncadd %s1012, %s1020
          %s1022 = smul.addr %s19, 128
          %s1023 = scalar_lea.hbm %s5, %s1022
          %s1025 = sshll.u32 %s1015, 4
          %s1026 = int_to_ptr.vmem [resolvable:$true] %s1025
          %1028 = dma.vmem_to_hbm [thread:$0]  %s1026, 128, %s1023, %s1012
        $region44: #{tpu_custom_call.1} parent=39 // pred_fallthru
          _
      $region40: #{tpu_custom_call.1} parent=5 // pred_fallthru
        _
      %p1029 = scmp.le.s32.totalorder 2, %s14
      // Predicated region
      $region45: #{tpu_custom_call.1} parent=5 // pred_check
        %p1030 = pneg %p1029
      $region46: #{tpu_custom_call.1} parent=5 // pred_check_branch
        %1032 = sbr.rel (%p1030) target = $region48
      $region47: #{tpu_custom_call.1} parent=5 // pred_region
        %s1033 = ssub.s32 %s14, 2
        // Predicated region
        $region49: #{tpu_custom_call.1} parent=47 // pred_check
          %p1034 = pneg %p158
        $region50: #{tpu_custom_call.1} parent=47 // pred_check_branch
          %1036 = sbr.rel (%p1034) target = $region52
        $region51: #{tpu_custom_call.1} parent=47 // pred_region
          %s1037 = sand.u32 %s143, 1
          %s1038 = scalar_lea.sflag [#allocation3], %s1037
          %s1039 = sand.u32 %s143, 1
          %s1040 = smul.addr %s1039, 8
          %s1041 = scalar_lea.vmem [#allocation2], %s1040
          %1042 = dma.done %s1038, 128
        $region52: #{tpu_custom_call.1} parent=47 // pred_fallthru
          _
      $region48: #{tpu_custom_call.1} parent=5 // pred_fallthru
        _
    $region6: #{tpu_custom_call.1} parent=1 // loop_footer
      %s18 = sadd.s32 1, %s14
    $region7: #{tpu_custom_call.1} parent=1 // loop_footer_branch
      %13 = sbr.rel target = $region3
    $region8: #{tpu_custom_call.1} parent=1 // loop_exit
      _
    %1043 = vsyncpa [#allocation3], 1
    %s1044 = scalar_lea.sflag [#allocation3], 1
    %1045 = vsyncpa %s1044, 1

</llo_original>
